<compile_context>
chip_gen: v7x
topology: tpu7x:2x2x1
jax: 0.10.0
libtpu: 0.0.40
codegen_flags: <defaults>
</compile_context>

<pallas_src>
import functools

import jax
import jax.numpy as jnp
from jax.experimental import pallas as pl
from jax.experimental.pallas import tpu as pltpu

LOG_STD_MAX = 2.0
LOG_STD_MIN = -4.0


def _round_up(n, m):
    return ((n + m - 1) // m) * m


def policy_kernel(x_ref, w1_ref, b1_ref, w2_ref, b2_ref, wh_ref, bh_ref,
                  out_ref, *, action_dim):
    A = action_dim
    x = x_ref[...]                                        # (S, TM) bf16, lane-dense

    # fc1 + relu (MXU matmul with f32 accumulation; bias/relu in f32)
    h1 = jnp.dot(w1_ref[...], x, preferred_element_type=jnp.float32) + b1_ref[...]
    h1 = jnp.maximum(h1, 0.0)                             # (H1, TM) f32

    # fc2 + relu
    h2 = jnp.dot(w2_ref[...], h1.astype(jnp.bfloat16),
                 preferred_element_type=jnp.float32) + b2_ref[...]
    h2 = jnp.maximum(h2, 0.0)                             # (H2, TM) f32

    # fused heads: [fc_mean ; fc_log_std] in ONE matmul, split along sublane rows
    zh = jnp.dot(wh_ref[...], h2.astype(jnp.bfloat16),
                 preferred_element_type=jnp.float32) + bh_ref[...]   # (2A, TM)
    zm = zh[:A, :]
    zs = zh[A:, :]

    # sigmoid via EUP exp + approx reciprocal (EUP slot, frees VALU)
    mean = pl.reciprocal(1.0 + jnp.exp(-zm), approx=True)

    log_std = jnp.clip(zs, LOG_STD_MIN, LOG_STD_MAX)
    std = jnp.exp(log_std)

    # packed output slab [mean ; log_std ; std]: sublane-aligned, lane-dense stores
    out_ref[:A, :] = mean
    out_ref[A:2 * A, :] = log_std
    out_ref[2 * A:, :] = std


def _choose_tile(batch, tm):
    """Pick the batch tile TM (lane dim): multiple of 128, divides the padded batch
    exactly (minimal padding), and when the batch is large enough the grid keeps >= 2
    steps so the parallel axis can shard across both TensorCores on v7x."""
    tm = max(128, (tm // 128) * 128)
    bp = _round_up(batch, 128)
    min_steps = 2 if bp >= 256 else 1
    n_steps = max(-(-bp // tm), min_steps)
    tile = _round_up(-(-bp // n_steps), 128)
    return tile, n_steps * tile, n_steps


def prepare_params(p):
    """One-time packing/casting of Policy params for the kernel (hoisted out of the
    per-call path).  Weights keep the PyTorch (out_features, in_features) layout;
    biases are (out_features, 1).  Matmul weights are cast to bf16 once."""
    wh = jnp.concatenate([p["wm"], p["ws"]], axis=0)      # (2A, H2) packed heads
    bh = jnp.concatenate([p["bm"], p["bs"]], axis=0)      # (2A, 1)
    return {
        "w1": p["w1"].astype(jnp.bfloat16), "b1": p["b1"].astype(jnp.float32),
        "w2": p["w2"].astype(jnp.bfloat16), "b2": p["b2"].astype(jnp.float32),
        "wh": wh.astype(jnp.bfloat16),      "bh": bh.astype(jnp.float32),
    }


def policy_forward(x, prepared, *, tm=8192):
    """x: (B, state_dim) float32. Returns (mean, log_std, std), each (B, action_dim) f32.

    tm: max batch rows (lanes) per grid step; sweep 4k-16k on v7x, up to ~32k on
    v5e/v6e.  Weights/biases use a constant block index so they stay VMEM-resident
    across grid steps while x/out are software-pipelined.
    """
    B, S = x.shape
    H1 = prepared["w1"].shape[0]
    H2 = prepared["w2"].shape[0]
    A2 = prepared["wh"].shape[0]
    A = A2 // 2

    TM, Bp, n_steps = _choose_tile(B, tm)

    # Feature-major input (S, Bp); bf16 halves the x DMA bytes.  Callers that already
    # hold activations feature-major can pass them in directly and skip this transpose.
    x_t = x.T.astype(jnp.bfloat16)
    if Bp != B:
        x_t = jnp.pad(x_t, ((0, 0), (0, Bp - B)))

    resident = lambda i: (0, 0)   # same block every step -> weights stay in VMEM

    out = pl.pallas_call(
        functools.partial(policy_kernel, action_dim=A),
        out_shape=jax.ShapeDtypeStruct((3 * A, Bp), jnp.float32),
        grid=(n_steps,),
        in_specs=[
            pl.BlockSpec((S, TM), lambda i: (0, i)),      # x: tiled over batch (lanes)
            pl.BlockSpec((H1, S), resident),              # w1
            pl.BlockSpec((H1, 1), resident),              # b1
            pl.BlockSpec((H2, H1), resident),             # w2
            pl.BlockSpec((H2, 1), resident),              # b2
            pl.BlockSpec((A2, H2), resident),             # packed head weights
            pl.BlockSpec((A2, 1), resident),              # packed head biases
        ],
        out_specs=pl.BlockSpec((3 * A, TM), lambda i: (0, i)),
        compiler_params=pltpu.CompilerParams(
            dimension_semantics=("parallel",),            # shard batch across TCs on v7x
        ),
    )(x_t, prepared["w1"], prepared["b1"], prepared["w2"], prepared["b2"],
      prepared["wh"], prepared["bh"])

    out_bt = out[:, :B].T                                 # (B, 3A)
    mean = out_bt[:, :A]
    log_std = out_bt[:, A:2 * A]
    std = out_bt[:, 2 * A:]
    return mean, log_std, std


def init_params(key, state_dim, hidden1, hidden2, action_dim):
    """Mirrors Policy.initialize(): all layers N(0, 0.01) weights/biases, except
    fc_log_std bias which is N(-1.0, 0.01).  Weights in PyTorch (out, in) layout."""
    ks = jax.random.split(key, 8)
    std = 0.01

    def nrm(k, shape, mean=0.0):
        return mean + std * jax.random.normal(k, shape, dtype=jnp.float32)

    return {
        "w1": nrm(ks[0], (hidden1, state_dim)),
        "b1": nrm(ks[1], (hidden1, 1)),
        "w2": nrm(ks[2], (hidden2, hidden1)),
        "b2": nrm(ks[3], (hidden2, 1)),
        "wm": nrm(ks[4], (action_dim, hidden2)),
        "bm": nrm(ks[5], (action_dim, 1)),
        "ws": nrm(ks[6], (action_dim, hidden2)),
        "bs": nrm(ks[7], (action_dim, 1), mean=-1.0),     # initWeights2 bias
    }


def policy_forward_ref(x, p):
    """Pure-JAX f32 reference (matches the PyTorch module)."""
    h1 = jnp.maximum(x @ p["w1"].T + p["b1"].T, 0.0)
    h2 = jnp.maximum(h1 @ p["w2"].T + p["b2"].T, 0.0)
    mean = jax.nn.sigmoid(h2 @ p["wm"].T + p["bm"].T)
    log_std = jnp.clip(h2 @ p["ws"].T + p["bs"].T, LOG_STD_MIN, LOG_STD_MAX)
    return mean, log_std, jnp.exp(log_std)


if __name__ == "__main__":
    key = jax.random.PRNGKey(0)
    k_param, k_x = jax.random.split(key)

    batch = 8
    state_dim = 16
    hidden1 = 32
    hidden2 = 32
    action_dim = 8

    params = init_params(k_param, state_dim, hidden1, hidden2, action_dim)
    prepared = prepare_params(params)   # one-time head packing / bf16 cast (hoisted)
    x = jax.random.normal(k_x, (batch, state_dim), dtype=jnp.float32)

    mean, log_std, std = policy_forward(x, prepared)
    jax.block_until_ready((mean, log_std, std))

    # sanity check vs pure-JAX f32 reference
    mean_r, log_std_r, std_r = policy_forward_ref(x, params)
    assert mean.shape == (batch, action_dim)
    assert log_std.shape == (batch, action_dim)
    assert std.shape == (batch, action_dim)
    # bf16 matmul inputs + approx EUP reciprocal -> loose-ish tolerances
    assert jnp.allclose(mean, mean_r, atol=5e-3), "mean mismatch"
    assert jnp.allclose(log_std, log_std_r, atol=5e-3), "log_std mismatch"
    assert jnp.allclose(std, std_r, atol=5e-3), "std mismatch"

    print("KERNEL_OK")
</pallas_src>

<mosaic_0001>
module attributes {stable_mosaic.version = 11 : i64} {
  func.func @policy_kernel(%arg0: i32, %arg1: memref<16x128xbf16, #tpu.memory_space<vmem>>, %arg2: memref<32x16xbf16, #tpu.memory_space<vmem>>, %arg3: memref<32x1xf32, #tpu.memory_space<vmem>>, %arg4: memref<32x32xbf16, #tpu.memory_space<vmem>>, %arg5: memref<32x1xf32, #tpu.memory_space<vmem>>, %arg6: memref<16x32xbf16, #tpu.memory_space<vmem>>, %arg7: memref<16x1xf32, #tpu.memory_space<vmem>>, %arg8: memref<24x128xf32, #tpu.memory_space<vmem>>) attributes {dimension_semantics = [#tpu.dimension_semantics<parallel>], iteration_bounds = array<i64: 1>, scalar_prefetch = 0 : i64, scratch_operands = 0 : i64, tpu.core_type = #tpu.core_type<tc>, window_params = [{transform_indices = @transform_0, window_bounds = array<i64: 16, 128>}, {pipeline_mode = #tpu.pipeline_mode<synchronous>, transform_indices = @transform_1, window_bounds = array<i64: 32, 16>}, {pipeline_mode = #tpu.pipeline_mode<synchronous>, transform_indices = @transform_2, window_bounds = array<i64: 32, 1>}, {pipeline_mode = #tpu.pipeline_mode<synchronous>, transform_indices = @transform_3, window_bounds = array<i64: 32, 32>}, {pipeline_mode = #tpu.pipeline_mode<synchronous>, transform_indices = @transform_4, window_bounds = array<i64: 32, 1>}, {pipeline_mode = #tpu.pipeline_mode<synchronous>, transform_indices = @transform_5, window_bounds = array<i64: 16, 32>}, {pipeline_mode = #tpu.pipeline_mode<synchronous>, transform_indices = @transform_6, window_bounds = array<i64: 16, 1>}, {transform_indices = @transform_7, window_bounds = array<i64: 24, 128>}]} {
    %c0 = arith.constant 0 : index
    %c0_0 = arith.constant 0 : index
    %0 = vector.load %arg1[%c0, %c0_0] : memref<16x128xbf16, #tpu.memory_space<vmem>>, vector<16x128xbf16>
    %c0_1 = arith.constant 0 : index
    %c0_2 = arith.constant 0 : index
    %1 = vector.load %arg2[%c0_1, %c0_2] : memref<32x16xbf16, #tpu.memory_space<vmem>>, vector<32x16xbf16>
    %cst = arith.constant dense<0.000000e+00> : vector<32x128xf32>
    %2 = tpu.matmul %1, %0, %cst {dimension_numbers = #tpu.dot_dimension_numbers<[1], [0], [0], [1], [0, 0, 1, 1], [], []>} : vector<32x16xbf16>, vector<16x128xbf16>, vector<32x128xf32> -> vector<32x128xf32>
    %c0_3 = arith.constant 0 : index
    %c0_4 = arith.constant 0 : index
    %3 = vector.load %arg3[%c0_3, %c0_4] : memref<32x1xf32, #tpu.memory_space<vmem>>, vector<32x1xf32>
    %4 = vector.broadcast %3 : vector<32x1xf32> to vector<32x128xf32>
    %5 = arith.addf %2, %4 : vector<32x128xf32>
    %cst_5 = arith.constant 0.000000e+00 : f32
    %6 = vector.broadcast %cst_5 : f32 to vector<32x128xf32>
    %7 = arith.maximumf %5, %6 : vector<32x128xf32>
    %c0_6 = arith.constant 0 : index
    %c0_7 = arith.constant 0 : index
    %8 = vector.load %arg4[%c0_6, %c0_7] : memref<32x32xbf16, #tpu.memory_space<vmem>>, vector<32x32xbf16>
    %9 = arith.truncf %7 : vector<32x128xf32> to vector<32x128xbf16>
    %cst_8 = arith.constant dense<0.000000e+00> : vector<32x128xf32>
    %10 = tpu.matmul %8, %9, %cst_8 {dimension_numbers = #tpu.dot_dimension_numbers<[1], [0], [0], [1], [0, 0, 1, 1], [], []>} : vector<32x32xbf16>, vector<32x128xbf16>, vector<32x128xf32> -> vector<32x128xf32>
    %c0_9 = arith.constant 0 : index
    %c0_10 = arith.constant 0 : index
    %11 = vector.load %arg5[%c0_9, %c0_10] : memref<32x1xf32, #tpu.memory_space<vmem>>, vector<32x1xf32>
    %12 = vector.broadcast %11 : vector<32x1xf32> to vector<32x128xf32>
    %13 = arith.addf %10, %12 : vector<32x128xf32>
    %cst_11 = arith.constant 0.000000e+00 : f32
    %14 = vector.broadcast %cst_11 : f32 to vector<32x128xf32>
    %15 = arith.maximumf %13, %14 : vector<32x128xf32>
    %c0_12 = arith.constant 0 : index
    %c0_13 = arith.constant 0 : index
    %16 = vector.load %arg6[%c0_12, %c0_13] : memref<16x32xbf16, #tpu.memory_space<vmem>>, vector<16x32xbf16>
    %17 = arith.truncf %15 : vector<32x128xf32> to vector<32x128xbf16>
    %cst_14 = arith.constant dense<0.000000e+00> : vector<16x128xf32>
    %18 = tpu.matmul %16, %17, %cst_14 {dimension_numbers = #tpu.dot_dimension_numbers<[1], [0], [0], [1], [0, 0, 1, 1], [], []>} : vector<16x32xbf16>, vector<32x128xbf16>, vector<16x128xf32> -> vector<16x128xf32>
    %c0_15 = arith.constant 0 : index
    %c0_16 = arith.constant 0 : index
    %19 = vector.load %arg7[%c0_15, %c0_16] : memref<16x1xf32, #tpu.memory_space<vmem>>, vector<16x1xf32>
    %20 = vector.broadcast %19 : vector<16x1xf32> to vector<16x128xf32>
    %21 = arith.addf %18, %20 : vector<16x128xf32>
    %22 = vector.extract_strided_slice %21 {offsets = [0, 0], sizes = [8, 128], strides = [1, 1]} : vector<16x128xf32> to vector<8x128xf32>
    %23 = vector.extract_strided_slice %21 {offsets = [8, 0], sizes = [8, 128], strides = [1, 1]} : vector<16x128xf32> to vector<8x128xf32>
    %cst_17 = arith.constant 0.000000e+00 : f32
    %24 = vector.broadcast %cst_17 : f32 to vector<8x128xf32>
    %25 = arith.subf %24, %22 : vector<8x128xf32>
    %26 = math.exp %25 : vector<8x128xf32>
    %cst_18 = arith.constant 1.000000e+00 : f32
    %27 = vector.broadcast %cst_18 : f32 to vector<8x128xf32>
    %28 = arith.addf %27, %26 : vector<8x128xf32>
    %29 = tpu.reciprocal %28 {approx = true} : vector<8x128xf32> -> vector<8x128xf32>
    %cst_19 = arith.constant -4.000000e+00 : f32
    %cst_20 = arith.constant 2.000000e+00 : f32
    %30 = vector.broadcast %cst_19 : f32 to vector<8x128xf32>
    %31 = arith.maximumf %30, %23 : vector<8x128xf32>
    %32 = vector.broadcast %cst_20 : f32 to vector<8x128xf32>
    %33 = arith.minimumf %32, %31 : vector<8x128xf32>
    %34 = math.exp %33 : vector<8x128xf32>
    %c0_21 = arith.constant 0 : index
    %c0_22 = arith.constant 0 : index
    %35 = vector.load %arg8[%c0_21, %c0_22] : memref<24x128xf32, #tpu.memory_space<vmem>>, vector<8x128xf32>
    tpu.vector_store %arg8[%c0_21, %c0_22], %29 {strides = array<i32>} : memref<24x128xf32, #tpu.memory_space<vmem>>, vector<8x128xf32>,
    %c8 = arith.constant 8 : index
    %c0_23 = arith.constant 0 : index
    %36 = vector.load %arg8[%c8, %c0_23] : memref<24x128xf32, #tpu.memory_space<vmem>>, vector<8x128xf32>
    tpu.vector_store %arg8[%c8, %c0_23], %33 {strides = array<i32>} : memref<24x128xf32, #tpu.memory_space<vmem>>, vector<8x128xf32>,
    %c16 = arith.constant 16 : index
    %c0_24 = arith.constant 0 : index
    %37 = vector.load %arg8[%c16, %c0_24] : memref<24x128xf32, #tpu.memory_space<vmem>>, vector<8x128xf32>
    tpu.vector_store %arg8[%c16, %c0_24], %34 {strides = array<i32>} : memref<24x128xf32, #tpu.memory_space<vmem>>, vector<8x128xf32>,
    return
  }
  func.func @transform_0(%arg0: i32) -> (i32, i32) {
    %c0_i32 = arith.constant 0 : i32
    %c0_i32_0 = arith.constant 0 : i32
    return %c0_i32, %arg0 : i32, i32
  }
  func.func @transform_1(%arg0: i32) -> (i32, i32) {
    %c0_i32 = arith.constant 0 : i32
    %c0_i32_0 = arith.constant 0 : i32
    %c0_i32_1 = arith.constant 0 : i32
    return %c0_i32, %c0_i32_0 : i32, i32
  }
  func.func @transform_2(%arg0: i32) -> (i32, i32) {
    %c0_i32 = arith.constant 0 : i32
    %c0_i32_0 = arith.constant 0 : i32
    %c0_i32_1 = arith.constant 0 : i32
    return %c0_i32, %c0_i32_0 : i32, i32
  }
  func.func @transform_3(%arg0: i32) -> (i32, i32) {
    %c0_i32 = arith.constant 0 : i32
    %c0_i32_0 = arith.constant 0 : i32
    %c0_i32_1 = arith.constant 0 : i32
    return %c0_i32, %c0_i32_0 : i32, i32
  }
  func.func @transform_4(%arg0: i32) -> (i32, i32) {
    %c0_i32 = arith.constant 0 : i32
    %c0_i32_0 = arith.constant 0 : i32
    %c0_i32_1 = arith.constant 0 : i32
    return %c0_i32, %c0_i32_0 : i32, i32
  }
  func.func @transform_5(%arg0: i32) -> (i32, i32) {
    %c0_i32 = arith.constant 0 : i32
    %c0_i32_0 = arith.constant 0 : i32
    %c0_i32_1 = arith.constant 0 : i32
    return %c0_i32, %c0_i32_0 : i32, i32
  }
  func.func @transform_6(%arg0: i32) -> (i32, i32) {
    %c0_i32 = arith.constant 0 : i32
    %c0_i32_0 = arith.constant 0 : i32
    %c0_i32_1 = arith.constant 0 : i32
    return %c0_i32, %c0_i32_0 : i32, i32
  }
  func.func @transform_7(%arg0: i32) -> (i32, i32) {
    %c0_i32 = arith.constant 0 : i32
    %c0_i32_0 = arith.constant 0 : i32
    return %c0_i32, %arg0 : i32, i32
  }
}

</mosaic_0001>

<llo_original>
// kernel: tpu_custom_call.1
$region0: #{tpu_custom_call.1}
  #allocation0 [shape = 'u32[]', space=smem, size = 0x4, offset = 0x4, fixed_abs, tag = 'smem constant byte address 0x4 - core index']
  #allocation1 [shape = 'u32[144,128]{1,0:T(1,128)}', space=vmem, size = 0x12000, scoped, tag = 'internal scratch']
  %s0 = inlined_call_operand.vmem [shape: bf16[16,128], index: 0, kind: input, shape index: {}]
  %s1 = inlined_call_operand.vmem [shape: bf16[32,16], index: 1, kind: input, shape index: {}]
  %s2 = inlined_call_operand.vmem [shape: f32[32,1], index: 2, kind: input, shape index: {}]
  %s3 = inlined_call_operand.vmem [shape: bf16[32,32], index: 3, kind: input, shape index: {}]
  %s4 = inlined_call_operand.vmem [shape: f32[32,1], index: 4, kind: input, shape index: {}]
  %s5 = inlined_call_operand.vmem [shape: bf16[16,32], index: 5, kind: input, shape index: {}]
  %s6 = inlined_call_operand.vmem [shape: f32[16,1], index: 6, kind: input, shape index: {}]
  %s7 = inlined_call_operand.hbm [shape: f32[24,128], index: 7, kind: output, shape index: {}]
  %s8 = sld [smem:[#allocation0]]
  $region38: #{tpu_custom_call.1} parent=0
    _
  %s10 = ssub.s32 1, %s8
  %s11 = scalar_select 0, %s10, %s8
  $region1: #{tpu_custom_call.1} parent=0
    #allocation2 [shape = 'u8[12288]{0}', space=vmem, size = 0x3000, scoped, tag = 'output window, operand 0, single buffered']
    #allocation3 [shape = 's32[1]{0}', space=sflag, size = 0x4, scoped, tag = 'scoped memory for tpu_custom_call.1']
    %12 = vsyncpa [#allocation3], 0
    // Predicated region
    $region2: #{tpu_custom_call.1} parent=1 // pred_check
      _
    $region3: #{tpu_custom_call.1} parent=1 // pred_check_branch
      %14 = sbr.rel (0) target = $region5
    $region4: #{tpu_custom_call.1} parent=1 // pred_region
      _
    $region5: #{tpu_custom_call.1} parent=1 // pred_fallthru
      _
    // Predicated region
    $region6: #{tpu_custom_call.1} parent=1 // pred_check
      _
    $region7: #{tpu_custom_call.1} parent=1 // pred_check_branch
      %16 = sbr.rel (0) target = $region9
    $region8: #{tpu_custom_call.1} parent=1 // pred_region
      _
    $region9: #{tpu_custom_call.1} parent=1 // pred_fallthru
      _
    // Predicated region
    $region10: #{tpu_custom_call.1} parent=1 // pred_check
      _
    $region11: #{tpu_custom_call.1} parent=1 // pred_check_branch
      %18 = sbr.rel (0) target = $region13
    $region12: #{tpu_custom_call.1} parent=1 // pred_region
      _
    $region13: #{tpu_custom_call.1} parent=1 // pred_fallthru
      _
    // Predicated region
    $region14: #{tpu_custom_call.1} parent=1 // pred_check
      _
    $region15: #{tpu_custom_call.1} parent=1 // pred_check_branch
      %20 = sbr.rel (0) target = $region17
    $region16: #{tpu_custom_call.1} parent=1 // pred_region
      _
    $region17: #{tpu_custom_call.1} parent=1 // pred_fallthru
      _
    // Predicated region
    $region18: #{tpu_custom_call.1} parent=1 // pred_check
      _
    $region19: #{tpu_custom_call.1} parent=1 // pred_check_branch
      %22 = sbr.rel (0) target = $region21
    $region20: #{tpu_custom_call.1} parent=1 // pred_region
      _
    $region21: #{tpu_custom_call.1} parent=1 // pred_fallthru
      _
    // Predicated region
    $region22: #{tpu_custom_call.1} parent=1 // pred_check
      _
    $region23: #{tpu_custom_call.1} parent=1 // pred_check_branch
      %24 = sbr.rel (0) target = $region25
    $region24: #{tpu_custom_call.1} parent=1 // pred_region
      _
    $region25: #{tpu_custom_call.1} parent=1 // pred_fallthru
      _
    // Predicated region
    $region26: #{tpu_custom_call.1} parent=1 // pred_check
      _
    $region27: #{tpu_custom_call.1} parent=1 // pred_check_branch
      %26 = sbr.rel (0) target = $region29
    $region28: #{tpu_custom_call.1} parent=1 // pred_region
      _
    $region29: #{tpu_custom_call.1} parent=1 // pred_fallthru
      _
    %v28 = vld [vmem:[%s0] sm:$0xf]
    %v29 = vld [vmem:[%s0 + $0x4] sm:$0xf]
    %v30 = vld [vmem:[%s1] sm:$0xf]
    %v31 = vld [vmem:[%s1 + $0x4] sm:$0xf]
    %v32 = vld [vmem:[%s1 + $0x8] sm:$0xf]
    %v33 = vld [vmem:[%s1 + $0xc] sm:$0xf]
    %v34 = vld [vmem:[%s2] sm:$0xff]
    %v35 = vld [vmem:[%s2 + $0x8] sm:$0xff]
    %v36 = vld [vmem:[%s2 + $0x10] sm:$0xff]
    %v37 = vld [vmem:[%s2 + $0x18] sm:$0xff]
    %39 = vset.pattern.permute.xlu0 0
    %40 = vperm.xlu0 %39, %v34
    %v41 = vpop.permute.xlu0 %40
    %44 = vset.pattern.permute.xlu0 0
    %45 = vperm.xlu0 %44, %v35
    %v46 = vpop.permute.xlu0 %45
    %49 = vset.pattern.permute.xlu0 0
    %50 = vperm.xlu0 %49, %v36
    %v51 = vpop.permute.xlu0 %50
    %54 = vset.pattern.permute.xlu0 0
    %55 = vperm.xlu0 %54, %v37
    %v56 = vpop.permute.xlu0 %55
    %v62 = vunpack.c.l.b16 %v30
    %v63 = vunpack.c.l.b16 %v31
    %v64 = vunpack.c.l.b16 %v32
    %v65 = vunpack.c.l.b16 %v33
    %v66 = vpack.c.b16 %v63, %v62
    %v67 = vpack.c.b16 %v65, %v64
    %v70 = vunpack.c.l.b16 %v28
    %v71 = vunpack.c.l.b16 %v29
    %v72 = vpack.c.b16 %v71, %v70
    %vm74 = vcmask 130048
    %v76 = vsel %vm74, %v66, 0
    %v79 = vsel %vm74, %v67, 0
    %81 = vmatprep.subr.bf16.mxu0 0
    %82 = vmatpush1.bf16.msra.mxu0 %v72
    %83 = vmatprep.subr.bf16.mxu0 0
    %84 = vmatpush1.bf16.msra.mxu0 0
    %85 = vmatprep.subr.bf16.mxu0 0
    %86 = vmatpush1.bf16.msra.mxu0 0
    %87 = vmatprep.subr.bf16.mxu0 0
    %88 = vmatpush1.bf16.msra.mxu0 0
    %89 = vmatprep.subr.bf16.mxu0 0
    %90 = vmatpush1.bf16.msra.mxu0 0
    %91 = vmatprep.subr.bf16.mxu0 0
    %92 = vmatpush1.bf16.msra.mxu0 0
    %93 = vmatprep.subr.bf16.mxu0 0
    %94 = vmatpush1.bf16.msra.mxu0 0
    %95 = vmatprep.subr.bf16.mxu0 0
    %96 = vmatpush1.bf16.msra.mxu0 0
    %97 = vmatprep.subr.bf16.mxu0 0
    %98 = vmatpush1.bf16.msra.mxu0 0
    %99 = vmatprep.subr.bf16.mxu0 0
    %100 = vmatpush1.bf16.msra.mxu0 0
    %101 = vmatprep.subr.bf16.mxu0 0
    %102 = vmatpush1.bf16.msra.mxu0 0
    %103 = vmatprep.subr.bf16.mxu0 0
    %104 = vmatpush1.bf16.msra.mxu0 0
    %105 = vmatprep.subr.bf16.mxu0 0
    %106 = vmatpush1.bf16.msra.mxu0 0
    %107 = vmatprep.subr.bf16.mxu0 0
    %108 = vmatpush1.bf16.msra.mxu0 0
    %109 = vmatprep.subr.bf16.mxu0 0
    %110 = vmatpush1.bf16.msra.mxu0 0
    %111 = vmatprep.subr.bf16.mxu0 0
    %112 = vmatpush1.bf16.msra.mxu0 0
    %113 = vmatprep.mubr.bf16.mxu0 0
    %114 = vmatmul.mubr.bf16.gmra.mrb[0].mxu0 %v76
    %v115 = vpop.f32.mrb[0].mxu0
    %v116 = vadd.f32 %v41, %v115
    %v117 = vpop.f32.mrb[0].mxu0
    %v118 = vpop.f32.mrb[0].mxu0
    %v119 = vadd.f32 %v46, %v118
    %v120 = vpop.f32.mrb[0].mxu0
    %121 = vmatprep.mubr.bf16.mxu0 0
    %122 = vmatmul.mubr.bf16.gmra.mrb[0].mxu0 %v79
    %v123 = vpop.f32.mrb[0].mxu0
    %v124 = vadd.f32 %v51, %v123
    %v125 = vpop.f32.mrb[0].mxu0
    %v126 = vpop.f32.mrb[0].mxu0
    %v127 = vadd.f32 %v56, %v126
    %v128 = vpop.f32.mrb[0].mxu0
    %129 = vdwg.mxu0
    %v130 = vmax.f32 %v116, 0.0
    %v131 = vmax.f32 %v119, 0.0
    %v132 = vmax.f32 %v124, 0.0
    %v133 = vmax.f32 %v127, 0.0
    %v134 = vld [vmem:[%s3] sm:$0xf]
    %v135 = vld [vmem:[%s3 + $0x4] sm:$0xf]
    %v136 = vld [vmem:[%s3 + $0x8] sm:$0xf]
    %v137 = vld [vmem:[%s3 + $0xc] sm:$0xf]
    %v138 = vpack.c.bf16 %v131, %v130
    %v139 = vpack.c.bf16 %v133, %v132
    %v140 = vld [vmem:[%s4] sm:$0xff]
    %v141 = vld [vmem:[%s4 + $0x8] sm:$0xff]
    %v142 = vld [vmem:[%s4 + $0x10] sm:$0xff]
    %v143 = vld [vmem:[%s4 + $0x18] sm:$0xff]
    %145 = vset.pattern.permute.xlu0 0
    %146 = vperm.xlu0 %145, %v140
    %v147 = vpop.permute.xlu0 %146
    %150 = vset.pattern.permute.xlu0 0
    %151 = vperm.xlu0 %150, %v141
    %v152 = vpop.permute.xlu0 %151
    %155 = vset.pattern.permute.xlu0 0
    %156 = vperm.xlu0 %155, %v142
    %v157 = vpop.permute.xlu0 %156
    %160 = vset.pattern.permute.xlu0 0
    %161 = vperm.xlu0 %160, %v143
    %v162 = vpop.permute.xlu0 %161
    %v168 = vunpack.c.l.b16 %v134
    %v169 = vunpack.c.l.b16 %v135
    %v170 = vunpack.c.l.b16 %v136
    %v171 = vunpack.c.l.b16 %v137
    %v172 = vpack.c.b16 %v169, %v168
    %v173 = vpack.c.b16 %v171, %v170
    %vm174 = vcmask 261120
    %v176 = vsel %vm174, %v172, 0
    %v179 = vsel %vm174, %v173, 0
    %181 = vmatprep.subr.bf16.mxu0 0
    %182 = vmatpush1.bf16.msra.mxu0 %v138
    %183 = vmatprep.subr.bf16.mxu0 0
    %184 = vmatpush1.bf16.msra.mxu0 %v139
    %185 = vmatprep.subr.bf16.mxu0 0
    %186 = vmatpush1.bf16.msra.mxu0 0
    %187 = vmatprep.subr.bf16.mxu0 0
    %188 = vmatpush1.bf16.msra.mxu0 0
    %189 = vmatprep.subr.bf16.mxu0 0
    %190 = vmatpush1.bf16.msra.mxu0 0
    %191 = vmatprep.subr.bf16.mxu0 0
    %192 = vmatpush1.bf16.msra.mxu0 0
    %193 = vmatprep.subr.bf16.mxu0 0
    %194 = vmatpush1.bf16.msra.mxu0 0
    %195 = vmatprep.subr.bf16.mxu0 0
    %196 = vmatpush1.bf16.msra.mxu0 0
    %197 = vmatprep.subr.bf16.mxu0 0
    %198 = vmatpush1.bf16.msra.mxu0 0
    %199 = vmatprep.subr.bf16.mxu0 0
    %200 = vmatpush1.bf16.msra.mxu0 0
    %201 = vmatprep.subr.bf16.mxu0 0
    %202 = vmatpush1.bf16.msra.mxu0 0
    %203 = vmatprep.subr.bf16.mxu0 0
    %204 = vmatpush1.bf16.msra.mxu0 0
    %205 = vmatprep.subr.bf16.mxu0 0
    %206 = vmatpush1.bf16.msra.mxu0 0
    %207 = vmatprep.subr.bf16.mxu0 0
    %208 = vmatpush1.bf16.msra.mxu0 0
    %209 = vmatprep.subr.bf16.mxu0 0
    %210 = vmatpush1.bf16.msra.mxu0 0
    %211 = vmatprep.subr.bf16.mxu0 0
    %212 = vmatpush1.bf16.msra.mxu0 0
    %213 = vmatprep.mubr.bf16.mxu0 0
    %214 = vmatmul.mubr.bf16.gmra.mrb[0].mxu0 %v176
    %v215 = vpop.f32.mrb[0].mxu0
    %v216 = vadd.f32 %v147, %v215
    %v217 = vpop.f32.mrb[0].mxu0
    %v218 = vpop.f32.mrb[0].mxu0
    %v219 = vadd.f32 %v152, %v218
    %v220 = vpop.f32.mrb[0].mxu0
    %221 = vmatprep.mubr.bf16.mxu0 0
    %222 = vmatmul.mubr.bf16.gmra.mrb[0].mxu0 %v179
    %v223 = vpop.f32.mrb[0].mxu0
    %v224 = vadd.f32 %v157, %v223
    %v225 = vpop.f32.mrb[0].mxu0
    %v226 = vpop.f32.mrb[0].mxu0
    %v227 = vadd.f32 %v162, %v226
    %v228 = vpop.f32.mrb[0].mxu0
    %229 = vdwg.mxu0
    %v230 = vmax.f32 %v216, 0.0
    %v231 = vmax.f32 %v219, 0.0
    %v232 = vmax.f32 %v224, 0.0
    %v233 = vmax.f32 %v227, 0.0
    %v234 = vld [vmem:[%s5] sm:$0xf]
    %v235 = vld [vmem:[%s5 + $0x4] sm:$0xf]
    %v236 = vpack.c.bf16 %v231, %v230
    %v237 = vpack.c.bf16 %v233, %v232
    %v238 = vld [vmem:[%s6] sm:$0xff]
    %v239 = vld [vmem:[%s6 + $0x8] sm:$0xff]
    %241 = vset.pattern.permute.xlu0 0
    %242 = vperm.xlu0 %241, %v238
    %v243 = vpop.permute.xlu0 %242
    %246 = vset.pattern.permute.xlu0 0
    %247 = vperm.xlu0 %246, %v239
    %v248 = vpop.permute.xlu0 %247
    %v252 = vunpack.c.l.b16 %v234
    %v253 = vunpack.c.l.b16 %v235
    %v254 = vpack.c.b16 %v253, %v252
    %v256 = vsel %vm174, %v254, 0
    %258 = vmatprep.subr.bf16.mxu0 0
    %259 = vmatpush1.bf16.msra.mxu0 %v236
    %260 = vmatprep.subr.bf16.mxu0 0
    %261 = vmatpush1.bf16.msra.mxu0 %v237
    %262 = vmatprep.subr.bf16.mxu0 0
    %263 = vmatpush1.bf16.msra.mxu0 0
    %264 = vmatprep.subr.bf16.mxu0 0
    %265 = vmatpush1.bf16.msra.mxu0 0
    %266 = vmatprep.subr.bf16.mxu0 0
    %267 = vmatpush1.bf16.msra.mxu0 0
    %268 = vmatprep.subr.bf16.mxu0 0
    %269 = vmatpush1.bf16.msra.mxu0 0
    %270 = vmatprep.subr.bf16.mxu0 0
    %271 = vmatpush1.bf16.msra.mxu0 0
    %272 = vmatprep.subr.bf16.mxu0 0
    %273 = vmatpush1.bf16.msra.mxu0 0
    %274 = vmatprep.subr.bf16.mxu0 0
    %275 = vmatpush1.bf16.msra.mxu0 0
    %276 = vmatprep.subr.bf16.mxu0 0
    %277 = vmatpush1.bf16.msra.mxu0 0
    %278 = vmatprep.subr.bf16.mxu0 0
    %279 = vmatpush1.bf16.msra.mxu0 0
    %280 = vmatprep.subr.bf16.mxu0 0
    %281 = vmatpush1.bf16.msra.mxu0 0
    %282 = vmatprep.subr.bf16.mxu0 0
    %283 = vmatpush1.bf16.msra.mxu0 0
    %284 = vmatprep.subr.bf16.mxu0 0
    %285 = vmatpush1.bf16.msra.mxu0 0
    %286 = vmatprep.subr.bf16.mxu0 0
    %287 = vmatpush1.bf16.msra.mxu0 0
    %288 = vmatprep.subr.bf16.mxu0 0
    %289 = vmatpush1.bf16.msra.mxu0 0
    %290 = vmatprep.mubr.bf16.mxu0 0
    %291 = vmatmul.mubr.bf16.gmra.mrb[0].mxu0 %v256
    %v292 = vpop.f32.mrb[0].mxu0
    %v293 = vadd.f32 %v243, %v292
    %v294 = vpop.f32.mrb[0].mxu0
    %v295 = vpop.f32.mrb[0].mxu0
    %v296 = vadd.f32 %v248, %v295
    %v297 = vpop.f32.mrb[0].mxu0
    %298 = vdwg.mxu0
    %v299 = vsub.f32 0.0, %v293
    %v300 = vmul.f32 %v299, 1.442695
    %v301 = vpow.pop %v300
    %v302 = vadd.f32 %v301, 1.0
    %v303 = vrcp.pop %v302
    %v304 = vmax.f32 %v296, -4.0
    %v305 = vmin.f32 %v304, 2.0
    %v306 = vmul.f32 %v305, 1.442695
    %v307 = vpow.pop %v306
    %308 = vst [vmem:[#allocation2] sm:$0xff] %v303
    %309 = vst [vmem:[#allocation2 + $0x8] sm:$0xff] %v305
    %310 = vst [vmem:[#allocation2 + $0x10] sm:$0xff] %v307
    // Predicated region
    $region30: #{tpu_custom_call.1} parent=1 // pred_check
      _
    $region31: #{tpu_custom_call.1} parent=1 // pred_check_branch
      %312 = sbr.rel (0) target = $region33
    $region32: #{tpu_custom_call.1} parent=1 // pred_region
      %s314 = ssub.s32 384, 384
      %315 = vsyncadd [#allocation3], %s314
      %s316 = sshll.u32 [#allocation2], 4
      %s317 = int_to_ptr.vmem [resolvable:$true] %s316
      %322 = dma.vmem_to_hbm [thread:$0]  %s317, 384, %s7, [#allocation3], 128, 128, 8
    $region33: #{tpu_custom_call.1} parent=1 // pred_fallthru
      _
    // Predicated region
    $region34: #{tpu_custom_call.1} parent=1 // pred_check
      _
    $region35: #{tpu_custom_call.1} parent=1 // pred_check_branch
      %324 = sbr.rel (0) target = $region37
    $region36: #{tpu_custom_call.1} parent=1 // pred_region
      %325 = dma.done [#allocation3], 384
    $region37: #{tpu_custom_call.1} parent=1 // pred_fallthru
      _
    %326 = vsyncpa [#allocation3], 1

</llo_original>
